<compile_context>
chip_gen: v6e
topology: v6e:2x2x1
jax: 0.10.0
libtpu: 0.0.40
codegen_flags: <defaults>
</compile_context>

<pallas_src>
import functools
import math

import jax
import jax.numpy as jnp
from jax.experimental import pallas as pl
from jax.experimental.pallas import tpu as pltpu


def _round_up(v, m):
    return ((v + m - 1) // m) * m


def _gcn_layer1_kernel(adj_ref, x_ref, w_ref, b_ref, h_ref, *, tm):
    """h_tile = relu([adj_tile @ x | x_tile] @ [[Wn1],[Ws1]] + b1)."""
    i = pl.program_id(0)
    # Neighbour aggregation in the tiled-friendly order: (adj_tile @ x) @ Wn1.
    ax = jnp.dot(adj_ref[...], x_ref[...], preferred_element_type=jnp.float32)
    # This tile's own rows of x (self term), sliced from the resident copy.
    row0 = pl.multiple_of(i * tm, 8)
    x_t = x_ref[pl.ds(row0, tm), :]
    # Fused neighbour+self matmul against the stacked weights [[Wn1],[Ws1]].
    cat = jnp.concatenate([ax.astype(x_t.dtype), x_t], axis=-1)
    h = jnp.dot(cat, w_ref[...], preferred_element_type=jnp.float32)
    h = jnp.maximum(h + b_ref[...], 0.0)          # bias + ReLU in f32
    # TODO(synk): training-mode dropout would need pltpu.prng_* masking here.
    h_ref[...] = h.astype(h_ref.dtype)


def _gcn_layer2_kernel(adj_ref, h_ref, w_ref, b_ref, o_ref, *, tm, n_classes):
    """o_tile = log_softmax([adj_tile @ h | h_tile] @ [[Wn2],[Ws2]] + b2)."""
    i = pl.program_id(0)
    ah = jnp.dot(adj_ref[...], h_ref[...], preferred_element_type=jnp.float32)
    row0 = pl.multiple_of(i * tm, 8)
    h_t = h_ref[pl.ds(row0, tm), :]
    cat = jnp.concatenate([ah.astype(h_t.dtype), h_t], axis=-1)
    y = jnp.dot(cat, w_ref[...], preferred_element_type=jnp.float32)
    y = y + b_ref[...]
    # Mask padded class columns so they don't pollute the softmax reduction.
    col = jax.lax.broadcasted_iota(jnp.int32, y.shape, 1)
    y = jnp.where(col < n_classes, y, -1e30)
    # log_softmax over classes (max-stabilized); exp/log run on the EUP.
    m = jnp.max(y, axis=-1, keepdims=True)
    z = y - m
    lse = jnp.log(jnp.sum(jnp.exp(z), axis=-1, keepdims=True))
    o_ref[...] = z - lse


def gcnv2_forward(x, adj, params, *, block_rows=256, matmul_dtype=jnp.bfloat16):
    """Fused GCNV2 forward. x: [N, F_in], adj: [N, N] -> [N, n_classes]."""
    wn1, ws1, b1, wn2, ws2, b2 = params
    n, f = x.shape
    h_dim = wn1.shape[1]
    c = wn2.shape[1]

    fp = _round_up(f, 128)
    hp = _round_up(h_dim, 128)
    cp = _round_up(c, 128)
    tm = min(block_rows, _round_up(n, 128))       # row-tile size (lane aligned)
    np_ = _round_up(n, tm)                        # padded node count
    grid = (np_ // tm,)

    # --- pad + cast operands (zero padding keeps the math exact) ---
    xp = jnp.zeros((np_, fp), matmul_dtype).at[:n, :f].set(x.astype(matmul_dtype))
    adjp = jnp.zeros((np_, np_), matmul_dtype).at[:n, :n].set(adj.astype(matmul_dtype))

    w1 = jnp.zeros((2 * fp, hp), matmul_dtype)
    w1 = w1.at[:f, :h_dim].set(wn1.astype(matmul_dtype))
    w1 = w1.at[fp:fp + f, :h_dim].set(ws1.astype(matmul_dtype))
    b1p = jnp.zeros((1, hp), jnp.float32).at[:, :h_dim].set(
        b1.reshape(1, -1).astype(jnp.float32))

    w2 = jnp.zeros((2 * hp, cp), matmul_dtype)
    w2 = w2.at[:h_dim, :c].set(wn2.astype(matmul_dtype))
    w2 = w2.at[hp:hp + h_dim, :c].set(ws2.astype(matmul_dtype))
    b2p = jnp.zeros((1, cp), jnp.float32).at[:, :c].set(
        b2.reshape(1, -1).astype(jnp.float32))

    cparams = pltpu.CompilerParams(
        dimension_semantics=("parallel",),        # shard rows on v7x's 2 TCs
        vmem_limit_bytes=48 * 1024 * 1024)        # >32 MiB default, <64 MiB v7x

    def row_tile(cols):
        return pl.BlockSpec((tm, cols), lambda i: (i, 0))

    def resident(shape):
        return pl.BlockSpec(shape, lambda i: (0, 0))

    # --- layer 1: h = relu(adj @ x @ Wn1 + x @ Ws1 + b1), stored bf16 ---
    h = pl.pallas_call(
        functools.partial(_gcn_layer1_kernel, tm=tm),
        grid=grid,
        in_specs=[row_tile(np_), resident((np_, fp)),
                  resident((2 * fp, hp)), resident((1, hp))],
        out_specs=row_tile(hp),
        out_shape=jax.ShapeDtypeStruct((np_, hp), matmul_dtype),
        compiler_params=cparams,
    )(adjp, xp, w1, b1p)

    # --- layer 2 + log_softmax ---
    out = pl.pallas_call(
        functools.partial(_gcn_layer2_kernel, tm=tm, n_classes=c),
        grid=grid,
        in_specs=[row_tile(np_), resident((np_, hp)),
                  resident((2 * hp, cp)), resident((1, cp))],
        out_specs=row_tile(cp),
        out_shape=jax.ShapeDtypeStruct((np_, cp), jnp.float32),
        compiler_params=cparams,
    )(adjp, h, w2, b2p)

    return out[:n, :c]


def _xavier_uniform(key, fan_in, fan_out):
    bound = math.sqrt(6.0 / (fan_in + fan_out))
    return jax.random.uniform(key, (fan_in, fan_out), jnp.float32,
                              minval=-bound, maxval=bound)


def make_params(key, input_dim, hidden_dim, output_dim):
    k1, k2, k3, k4 = jax.random.split(key, 4)
    wn1 = _xavier_uniform(k1, input_dim, hidden_dim)
    ws1 = _xavier_uniform(k2, input_dim, hidden_dim)
    b1 = jnp.zeros((hidden_dim,), jnp.float32)
    wn2 = _xavier_uniform(k3, hidden_dim, output_dim)
    ws2 = _xavier_uniform(k4, hidden_dim, output_dim)
    b2 = jnp.zeros((output_dim,), jnp.float32)
    return (wn1, ws1, b1, wn2, ws2, b2)


def _reference_f32(x, adj, params):
    """Pure-JAX f32 reference of the PyTorch forward (eval mode)."""
    wn1, ws1, b1, wn2, ws2, b2 = params
    h = adj @ (x @ wn1) + x @ ws1 + b1
    h = jnp.maximum(h, 0.0)
    y = adj @ (h @ wn2) + h @ ws2 + b2
    return jax.nn.log_softmax(y, axis=1)


def _reference_matched(x, adj, params, dtype=jnp.bfloat16):
    """Reference replicating the kernel's mixed-precision schedule exactly."""
    wn1, ws1, b1, wn2, ws2, b2 = params
    xb, ab = x.astype(dtype), adj.astype(dtype)
    wn1b, ws1b = wn1.astype(dtype), ws1.astype(dtype)
    wn2b, ws2b = wn2.astype(dtype), ws2.astype(dtype)
    ax = jnp.dot(ab, xb, preferred_element_type=jnp.float32).astype(dtype)
    h = (jnp.dot(ax, wn1b, preferred_element_type=jnp.float32)
         + jnp.dot(xb, ws1b, preferred_element_type=jnp.float32) + b1)
    hb = jnp.maximum(h, 0.0).astype(dtype)
    ah = jnp.dot(ab, hb, preferred_element_type=jnp.float32).astype(dtype)
    y = (jnp.dot(ah, wn2b, preferred_element_type=jnp.float32)
         + jnp.dot(hb, ws2b, preferred_element_type=jnp.float32) + b2)
    return jax.nn.log_softmax(y, axis=1)


if __name__ == "__main__":
    key = jax.random.PRNGKey(0)
    k_x, k_adj, k_p = jax.random.split(key, 3)

    num_nodes = 16
    input_dim = 16
    hidden_dim = 32
    output_dim = 8

    # Node features.
    x = jax.random.normal(k_x, (num_nodes, input_dim), jnp.float32)

    # Symmetric random adjacency with self-loops, row-normalized.
    a = (jax.random.uniform(k_adj, (num_nodes, num_nodes)) < 0.3).astype(jnp.float32)
    a = jnp.maximum(a, a.T) + jnp.eye(num_nodes, dtype=jnp.float32)
    adj = a / jnp.sum(a, axis=1, keepdims=True)

    params = make_params(k_p, input_dim, hidden_dim, output_dim)

    out = gcnv2_forward(x, adj, params)
    out = jax.block_until_ready(out)
    assert out.shape == (num_nodes, output_dim)

    # Tight check vs a reference that mirrors the kernel's bf16/f32 schedule.
    ref_matched = _reference_matched(x, adj, params)
    assert jnp.allclose(out, ref_matched, atol=2e-3, rtol=2e-3), \
        "mismatch vs matched-precision reference"

    # Loose check vs the full-f32 PyTorch-equivalent forward (bf16 matmuls).
    ref = _reference_f32(x, adj, params)
    assert jnp.allclose(out, ref, atol=1e-1, rtol=5e-2), \
        "mismatch vs f32 reference"

    print("KERNEL_OK")
</pallas_src>

<mosaic_0001>
module attributes {stable_mosaic.version = 11 : i64} {
  func.func @_gcn_layer1_kernel(%arg0: i32, %arg1: memref<128x128xbf16, #tpu.memory_space<vmem>>, %arg2: memref<128x128xbf16, #tpu.memory_space<vmem>>, %arg3: memref<256x128xbf16, #tpu.memory_space<vmem>>, %arg4: memref<1x128xf32, #tpu.memory_space<vmem>>, %arg5: memref<128x128xbf16, #tpu.memory_space<vmem>>) attributes {dimension_semantics = [#tpu.dimension_semantics<parallel>], iteration_bounds = array<i64: 1>, scalar_prefetch = 0 : i64, scratch_operands = 0 : i64, tpu.core_type = #tpu.core_type<tc>, window_params = [{transform_indices = @transform_0, window_bounds = array<i64: 128, 128>}, {pipeline_mode = #tpu.pipeline_mode<synchronous>, transform_indices = @transform_1, window_bounds = array<i64: 128, 128>}, {pipeline_mode = #tpu.pipeline_mode<synchronous>, transform_indices = @transform_2, window_bounds = array<i64: 256, 128>}, {pipeline_mode = #tpu.pipeline_mode<synchronous>, transform_indices = @transform_3, window_bounds = array<i64: 1, 128>}, {transform_indices = @transform_4, window_bounds = array<i64: 128, 128>}]} {
    %c0 = arith.constant 0 : index
    %c0_0 = arith.constant 0 : index
    %0 = vector.load %arg1[%c0, %c0_0] : memref<128x128xbf16, #tpu.memory_space<vmem>>, vector<128x128xbf16>
    %c0_1 = arith.constant 0 : index
    %c0_2 = arith.constant 0 : index
    %1 = vector.load %arg2[%c0_1, %c0_2] : memref<128x128xbf16, #tpu.memory_space<vmem>>, vector<128x128xbf16>
    %cst = arith.constant dense<0.000000e+00> : vector<128x128xf32>
    %2 = tpu.matmul %0, %1, %cst {dimension_numbers = #tpu.dot_dimension_numbers<[1], [0], [0], [1], [0, 0, 1, 1], [], []>} : vector<128x128xbf16>, vector<128x128xbf16>, vector<128x128xf32> -> vector<128x128xf32>
    %c128_i32 = arith.constant 128 : i32
    %3 = arith.muli %arg0, %c128_i32 : i32
    %4 = tpu.assume_multiple %3, 8 : i32
    %5 = arith.index_cast %4 : i32 to index
    %c0_3 = arith.constant 0 : index
    %6 = vector.load %arg2[%5, %c0_3] : memref<128x128xbf16, #tpu.memory_space<vmem>>, vector<128x128xbf16>
    %7 = arith.truncf %2 : vector<128x128xf32> to vector<128x128xbf16>
    %8 = tpu.concatenate %7, %6 in 1 : vector<128x128xbf16>, vector<128x128xbf16> -> vector<128x256xbf16>
    %c0_4 = arith.constant 0 : index
    %c0_5 = arith.constant 0 : index
    %9 = vector.load %arg3[%c0_4, %c0_5] : memref<256x128xbf16, #tpu.memory_space<vmem>>, vector<256x128xbf16>
    %cst_6 = arith.constant dense<0.000000e+00> : vector<128x128xf32>
    %10 = tpu.matmul %8, %9, %cst_6 {dimension_numbers = #tpu.dot_dimension_numbers<[1], [0], [0], [1], [0, 0, 1, 1], [], []>} : vector<128x256xbf16>, vector<256x128xbf16>, vector<128x128xf32> -> vector<128x128xf32>
    %c0_7 = arith.constant 0 : index
    %c0_8 = arith.constant 0 : index
    %11 = vector.load %arg4[%c0_7, %c0_8] : memref<1x128xf32, #tpu.memory_space<vmem>>, vector<1x128xf32>
    %12 = vector.broadcast %11 : vector<1x128xf32> to vector<128x128xf32>
    %13 = arith.addf %10, %12 : vector<128x128xf32>
    %cst_9 = arith.constant 0.000000e+00 : f32
    %14 = vector.broadcast %cst_9 : f32 to vector<128x128xf32>
    %15 = arith.maximumf %13, %14 : vector<128x128xf32>
    %16 = arith.truncf %15 : vector<128x128xf32> to vector<128x128xbf16>
    %c0_10 = arith.constant 0 : index
    %c0_11 = arith.constant 0 : index
    %17 = vector.load %arg5[%c0_10, %c0_11] : memref<128x128xbf16, #tpu.memory_space<vmem>>, vector<128x128xbf16>
    tpu.vector_store %arg5[%c0_10, %c0_11], %16 {strides = array<i32>} : memref<128x128xbf16, #tpu.memory_space<vmem>>, vector<128x128xbf16>,
    return
  }
  func.func @transform_0(%arg0: i32) -> (i32, i32) {
    %c0_i32 = arith.constant 0 : i32
    %c0_i32_0 = arith.constant 0 : i32
    return %arg0, %c0_i32 : i32, i32
  }
  func.func @transform_1(%arg0: i32) -> (i32, i32) {
    %c0_i32 = arith.constant 0 : i32
    %c0_i32_0 = arith.constant 0 : i32
    %c0_i32_1 = arith.constant 0 : i32
    return %c0_i32, %c0_i32_0 : i32, i32
  }
  func.func @transform_2(%arg0: i32) -> (i32, i32) {
    %c0_i32 = arith.constant 0 : i32
    %c0_i32_0 = arith.constant 0 : i32
    %c0_i32_1 = arith.constant 0 : i32
    return %c0_i32, %c0_i32_0 : i32, i32
  }
  func.func @transform_3(%arg0: i32) -> (i32, i32) {
    %c0_i32 = arith.constant 0 : i32
    %c0_i32_0 = arith.constant 0 : i32
    %c0_i32_1 = arith.constant 0 : i32
    return %c0_i32, %c0_i32_0 : i32, i32
  }
  func.func @transform_4(%arg0: i32) -> (i32, i32) {
    %c0_i32 = arith.constant 0 : i32
    %c0_i32_0 = arith.constant 0 : i32
    return %arg0, %c0_i32 : i32, i32
  }
}

</mosaic_0001>

<llo_original>
// kernel: tpu_custom_call.1
$region0: #{tpu_custom_call.1}
  #allocation0 [shape = 'u32[]', space=smem, size = 0x4, offset = 0x4, fixed_abs, tag = 'smem constant byte address 0x4 - core index']
  #allocation1 [shape = 'u32[144,128]{1,0:T(1,128)}', space=vmem, size = 0x12000, scoped, tag = 'internal scratch']
  %s0 = inlined_call_operand.hbm [shape: bf16[128,128], index: 0, kind: input, shape index: {}]
  %s1 = inlined_call_operand.hbm [shape: bf16[128,128], index: 1, kind: input, shape index: {}]
  %s2 = inlined_call_operand.hbm [shape: bf16[256,128], index: 2, kind: input, shape index: {}]
  %s3 = inlined_call_operand.vmem [shape: f32[1,128], index: 3, kind: input, shape index: {}]
  %s4 = inlined_call_operand.hbm [shape: bf16[128,128], index: 4, kind: output, shape index: {}]
  %s5 = sld [smem:[#allocation0]]
  $region38: #{tpu_custom_call.1} parent=0
    _
  %s7 = ssub.s32 1, %s5
  %s8 = scalar_select 0, %s7, %s5
  $region1: #{tpu_custom_call.1} parent=0
    #allocation2 [shape = 'u8[32768]{0}', space=vmem, size = 0x8000, scoped, tag = 'input window, operand 0, single buffered']
    #allocation3 [shape = 's32[1]{0}', space=sflag, size = 0x4, scoped, tag = 'scoped memory for tpu_custom_call.1']
    #allocation4 [shape = 's32[1]{0}', space=sflag, size = 0x4, scoped, tag = 'scoped memory for tpu_custom_call.1']
    #allocation5 [shape = 'u8[32768]{0}', space=vmem, size = 0x8000, scoped, tag = 'input window, operand 1, single buffered']
    #allocation6 [shape = 's32[1]{0}', space=sflag, size = 0x4, scoped, tag = 'scoped memory for tpu_custom_call.1']
    #allocation7 [shape = 'u8[65536]{0}', space=vmem, size = 0x10000, scoped, tag = 'input window, operand 2, single buffered']
    #allocation8 [shape = 'u8[32768]{0}', space=vmem, size = 0x8000, scoped, tag = 'output window, operand 0, single buffered']
    %9 = vsyncpa [#allocation3], 0
    %10 = vsyncpa [#allocation6], 0
    %11 = vsyncpa [#allocation4], 0
    // Predicated region
    $region2: #{tpu_custom_call.1} parent=1 // pred_check
      _
    $region3: #{tpu_custom_call.1} parent=1 // pred_check_branch
      %13 = sbr.rel (0) target = $region5
    $region4: #{tpu_custom_call.1} parent=1 // pred_region
      %s15 = ssub.s32 1024, 1024
      %16 = vsyncadd [#allocation3], %s15
      %s17 = sshll.u32 [#allocation2], 4
      %s18 = int_to_ptr.vmem [resolvable:$true] %s17
      %23 = dma.hbm_to_vmem [thread:$0]  %s0, 1024, %s18, [#allocation3], 64, 64, 4
    $region5: #{tpu_custom_call.1} parent=1 // pred_fallthru
      _
    // Predicated region
    $region6: #{tpu_custom_call.1} parent=1 // pred_check
      _
    $region7: #{tpu_custom_call.1} parent=1 // pred_check_branch
      %25 = sbr.rel (0) target = $region9
    $region8: #{tpu_custom_call.1} parent=1 // pred_region
      %s27 = ssub.s32 1024, 1024
      %28 = vsyncadd [#allocation6], %s27
      %s29 = sshll.u32 [#allocation5], 4
      %s30 = int_to_ptr.vmem [resolvable:$true] %s29
      %35 = dma.hbm_to_vmem [thread:$0]  %s1, 1024, %s30, [#allocation6], 64, 64, 4
    $region9: #{tpu_custom_call.1} parent=1 // pred_fallthru
      _
    // Predicated region
    $region10: #{tpu_custom_call.1} parent=1 // pred_check
      _
    $region11: #{tpu_custom_call.1} parent=1 // pred_check_branch
      %37 = sbr.rel (0) target = $region13
    $region12: #{tpu_custom_call.1} parent=1 // pred_region
      %s39 = ssub.s32 2048, 2048
      %40 = vsyncadd [#allocation6], %s39
      %s41 = sshll.u32 [#allocation7], 4
      %s42 = int_to_ptr.vmem [resolvable:$true] %s41
      %47 = dma.hbm_to_vmem [thread:$0]  %s2, 2048, %s42, [#allocation6], 64, 64, 4
    $region13: #{tpu_custom_call.1} parent=1 // pred_fallthru
      _
    // Predicated region
    $region14: #{tpu_custom_call.1} parent=1 // pred_check
      _
    $region15: #{tpu_custom_call.1} parent=1 // pred_check_branch
      %49 = sbr.rel (0) target = $region17
    $region16: #{tpu_custom_call.1} parent=1 // pred_region
      _
    $region17: #{tpu_custom_call.1} parent=1 // pred_fallthru
      _
    // Predicated region
    $region18: #{tpu_custom_call.1} parent=1 // pred_check
      _
    $region19: #{tpu_custom_call.1} parent=1 // pred_check_branch
      %51 = sbr.rel (0) target = $region21
    $region20: #{tpu_custom_call.1} parent=1 // pred_region
      %52 = dma.done [#allocation3], 1024
    $region21: #{tpu_custom_call.1} parent=1 // pred_fallthru
      _
    // Predicated region
    $region22: #{tpu_custom_call.1} parent=1 // pred_check
      _
    $region23: #{tpu_custom_call.1} parent=1 // pred_check_branch
      %54 = sbr.rel (0) target = $region25
    $region24: #{tpu_custom_call.1} parent=1 // pred_region
      %55 = dma.done [#allocation6], 1024
    $region25: #{tpu_custom_call.1} parent=1 // pred_fallthru
      _
    // Predicated region
    $region26: #{tpu_custom_call.1} parent=1 // pred_check
      _
    $region27: #{tpu_custom_call.1} parent=1 // pred_check_branch
      %57 = sbr.rel (0) target = $region29
    $region28: #{tpu_custom_call.1} parent=1 // pred_region
      %58 = dma.done [#allocation6], 2048
    $region29: #{tpu_custom_call.1} parent=1 // pred_fallthru
      _
    %v60 = vld [vmem:[#allocation2] sm:$0xf]
    %v61 = vld [vmem:[#allocation2 + $0x4] sm:$0xf]
    %v62 = vld [vmem:[#allocation2 + $0x8] sm:$0xf]
    %v63 = vld [vmem:[#allocation2 + $0xc] sm:$0xf]
    %v64 = vld [vmem:[#allocation2 + $0x10] sm:$0xf]
    %v65 = vld [vmem:[#allocation2 + $0x14] sm:$0xf]
    %v66 = vld [vmem:[#allocation2 + $0x18] sm:$0xf]
    %v67 = vld [vmem:[#allocation2 + $0x1c] sm:$0xf]
    %v68 = vld [vmem:[#allocation2 + $0x20] sm:$0xf]
    %v69 = vld [vmem:[#allocation2 + $0x24] sm:$0xf]
    %v70 = vld [vmem:[#allocation2 + $0x28] sm:$0xf]
    %v71 = vld [vmem:[#allocation2 + $0x2c] sm:$0xf]
    %v72 = vld [vmem:[#allocation2 + $0x30] sm:$0xf]
    %v73 = vld [vmem:[#allocation2 + $0x34] sm:$0xf]
    %v74 = vld [vmem:[#allocation2 + $0x38] sm:$0xf]
    %v75 = vld [vmem:[#allocation2 + $0x3c] sm:$0xf]
    %v76 = vld [vmem:[#allocation5] sm:$0xf]
    %v77 = vld [vmem:[#allocation5 + $0x4] sm:$0xf]
    %v78 = vld [vmem:[#allocation5 + $0x8] sm:$0xf]
    %v79 = vld [vmem:[#allocation5 + $0xc] sm:$0xf]
    %v80 = vld [vmem:[#allocation5 + $0x10] sm:$0xf]
    %v81 = vld [vmem:[#allocation5 + $0x14] sm:$0xf]
    %v82 = vld [vmem:[#allocation5 + $0x18] sm:$0xf]
    %v83 = vld [vmem:[#allocation5 + $0x1c] sm:$0xf]
    %v84 = vld [vmem:[#allocation5 + $0x20] sm:$0xf]
    %v85 = vld [vmem:[#allocation5 + $0x24] sm:$0xf]
    %v86 = vld [vmem:[#allocation5 + $0x28] sm:$0xf]
    %v87 = vld [vmem:[#allocation5 + $0x2c] sm:$0xf]
    %v88 = vld [vmem:[#allocation5 + $0x30] sm:$0xf]
    %v89 = vld [vmem:[#allocation5 + $0x34] sm:$0xf]
    %v90 = vld [vmem:[#allocation5 + $0x38] sm:$0xf]
    %v91 = vld [vmem:[#allocation5 + $0x3c] sm:$0xf]
    %v108 = vunpack.c.l.b16 %v60
    %v109 = vunpack.c.l.b16 %v61
    %v110 = vunpack.c.l.b16 %v62
    %v111 = vunpack.c.l.b16 %v63
    %v112 = vunpack.c.l.b16 %v64
    %v113 = vunpack.c.l.b16 %v65
    %v114 = vunpack.c.l.b16 %v66
    %v115 = vunpack.c.l.b16 %v67
    %v116 = vunpack.c.l.b16 %v68
    %v117 = vunpack.c.l.b16 %v69
    %v118 = vunpack.c.l.b16 %v70
    %v119 = vunpack.c.l.b16 %v71
    %v120 = vunpack.c.l.b16 %v72
    %v121 = vunpack.c.l.b16 %v73
    %v122 = vunpack.c.l.b16 %v74
    %v123 = vunpack.c.l.b16 %v75
    %v124 = vpack.c.b16 %v109, %v108
    %v125 = vpack.c.b16 %v111, %v110
    %v126 = vpack.c.b16 %v113, %v112
    %v127 = vpack.c.b16 %v115, %v114
    %v128 = vpack.c.b16 %v117, %v116
    %v129 = vpack.c.b16 %v119, %v118
    %v130 = vpack.c.b16 %v121, %v120
    %v131 = vpack.c.b16 %v123, %v122
    %v156 = vunpack.c.l.b16 %v76
    %v157 = vunpack.c.l.b16 %v77
    %v158 = vunpack.c.l.b16 %v78
    %v159 = vunpack.c.l.b16 %v79
    %v160 = vunpack.c.l.b16 %v80
    %v161 = vunpack.c.l.b16 %v81
    %v162 = vunpack.c.l.b16 %v82
    %v163 = vunpack.c.l.b16 %v83
    %v164 = vunpack.c.l.b16 %v84
    %v165 = vunpack.c.l.b16 %v85
    %v166 = vunpack.c.l.b16 %v86
    %v167 = vunpack.c.l.b16 %v87
    %v168 = vunpack.c.l.b16 %v88
    %v169 = vunpack.c.l.b16 %v89
    %v170 = vunpack.c.l.b16 %v90
    %v171 = vunpack.c.l.b16 %v91
    %v172 = vpack.c.b16 %v157, %v156
    %v173 = vpack.c.b16 %v159, %v158
    %v174 = vpack.c.b16 %v161, %v160
    %v175 = vpack.c.b16 %v163, %v162
    %v176 = vpack.c.b16 %v165, %v164
    %v177 = vpack.c.b16 %v167, %v166
    %v178 = vpack.c.b16 %v169, %v168
    %v179 = vpack.c.b16 %v171, %v170
    %188 = vmatprep.subr.bf16.mxu0 0
    %189 = vmatpush1.bf16.msra.mxu0 %v179
    %190 = vmatprep.subr.bf16.mxu0 0
    %191 = vmatpush1.bf16.msra.mxu0 %v178
    %192 = vmatprep.subr.bf16.mxu0 0
    %193 = vmatpush1.bf16.msra.mxu0 %v177
    %194 = vmatprep.subr.bf16.mxu0 0
    %195 = vmatpush1.bf16.msra.mxu0 %v176
    %196 = vmatprep.subr.bf16.mxu0 0
    %197 = vmatpush1.bf16.msra.mxu0 %v175
    %198 = vmatprep.subr.bf16.mxu0 0
    %199 = vmatpush1.bf16.msra.mxu0 %v174
    %200 = vmatprep.subr.bf16.mxu0 0
    %201 = vmatpush1.bf16.msra.mxu0 %v173
    %202 = vmatprep.subr.bf16.mxu0 0
    %203 = vmatpush1.bf16.msra.mxu0 %v172
    %204 = vmatprep.subr.bf16.mxu0 0
    %205 = vmatpush2.bf16.msra.mxu0 0
    %206 = vmatprep.subr.bf16.mxu0 0
    %207 = vmatpush2.bf16.msra.mxu0 0
    %208 = vmatprep.subr.bf16.mxu0 0
    %209 = vmatpush2.bf16.msra.mxu0 0
    %210 = vmatprep.subr.bf16.mxu0 0
    %211 = vmatpush2.bf16.msra.mxu0 0
    %212 = vmatprep.subr.bf16.mxu0 0
    %213 = vmatpush2.bf16.msra.mxu0 0
    %214 = vmatprep.subr.bf16.mxu0 0
    %215 = vmatpush2.bf16.msra.mxu0 0
    %216 = vmatprep.subr.bf16.mxu0 0
    %217 = vmatpush2.bf16.msra.mxu0 0
    %218 = vmatprep.subr.bf16.mxu0 0
    %219 = vmatpush2.bf16.msra.mxu0 0
    %220 = vmatprep.mubr.bf16.mxu0 0
    %221 = vmatmul.mubr.bf16.gmra.mxu0 %v124
    %v222 = vpop.f32.mrf.mxu0
    %v223 = vadd.f32 0.0, %v222
    %v224 = vpop.f32.mrf.mxu0
    %v225 = vpop.f32.mrf.mxu0
    %v226 = vadd.f32 0.0, %v225
    %v227 = vpop.f32.mrf.mxu0
    %228 = vmatprep.mubr.bf16.mxu0 0
    %229 = vmatmul.mubr.bf16.gmra.mxu0 %v125
    %v230 = vpop.f32.mrf.mxu0
    %v231 = vadd.f32 0.0, %v230
    %v232 = vpop.f32.mrf.mxu0
    %v233 = vpop.f32.mrf.mxu0
    %v234 = vadd.f32 0.0, %v233
    %v235 = vpop.f32.mrf.mxu0
    %236 = vmatprep.mubr.bf16.mxu0 0
    %237 = vmatmul.mubr.bf16.gmra.mxu0 %v126
    %v238 = vpop.f32.mrf.mxu0
    %v239 = vadd.f32 0.0, %v238
    %v240 = vpop.f32.mrf.mxu0
    %v241 = vpop.f32.mrf.mxu0
    %v242 = vadd.f32 0.0, %v241
    %v243 = vpop.f32.mrf.mxu0
    %244 = vmatprep.mubr.bf16.mxu0 0
    %245 = vmatmul.mubr.bf16.gmra.mxu0 %v127
    %v246 = vpop.f32.mrf.mxu0
    %v247 = vadd.f32 0.0, %v246
    %v248 = vpop.f32.mrf.mxu0
    %v249 = vpop.f32.mrf.mxu0
    %v250 = vadd.f32 0.0, %v249
    %v251 = vpop.f32.mrf.mxu0
    %252 = vmatprep.mubr.bf16.mxu0 0
    %253 = vmatmul.mubr.bf16.gmra.mxu0 %v128
    %v254 = vpop.f32.mrf.mxu0
    %v255 = vadd.f32 0.0, %v254
    %v256 = vpop.f32.mrf.mxu0
    %v257 = vpop.f32.mrf.mxu0
    %v258 = vadd.f32 0.0, %v257
    %v259 = vpop.f32.mrf.mxu0
    %260 = vmatprep.mubr.bf16.mxu0 0
    %261 = vmatmul.mubr.bf16.gmra.mxu0 %v129
    %v262 = vpop.f32.mrf.mxu0
    %v263 = vadd.f32 0.0, %v262
    %v264 = vpop.f32.mrf.mxu0
    %v265 = vpop.f32.mrf.mxu0
    %v266 = vadd.f32 0.0, %v265
    %v267 = vpop.f32.mrf.mxu0
    %268 = vmatprep.mubr.bf16.mxu0 0
    %269 = vmatmul.mubr.bf16.gmra.mxu0 %v130
    %v270 = vpop.f32.mrf.mxu0
    %v271 = vadd.f32 0.0, %v270
    %v272 = vpop.f32.mrf.mxu0
    %v273 = vpop.f32.mrf.mxu0
    %v274 = vadd.f32 0.0, %v273
    %v275 = vpop.f32.mrf.mxu0
    %276 = vmatprep.mubr.bf16.mxu0 0
    %277 = vmatmul.mubr.bf16.gmra.mxu0 %v131
    %v278 = vpop.f32.mrf.mxu0
    %v279 = vadd.f32 0.0, %v278
    %v280 = vpop.f32.mrf.mxu0
    %v281 = vpop.f32.mrf.mxu0
    %v282 = vadd.f32 0.0, %v281
    %v283 = vpop.f32.mrf.mxu0
    %284 = vdwg.mxu0
    %s285 = smul.u32 0, 128
    %s286 = sshra.s32 %s285, 3
    %s287 = sand.u32 %s285, 7
    %s288 = smul.addr %s286, 4
    %s289 = scalar_lea.vmem [#allocation5], %s288
    %v290 = vld [vmem:[%s289] sm:$0xf]
    %v291 = vld [vmem:[%s289 + $0x4] sm:$0xf]
    %v292 = vld [vmem:[%s289 + $0x8] sm:$0xf]
    %v293 = vld [vmem:[%s289 + $0xc] sm:$0xf]
    %v294 = vld [vmem:[%s289 + $0x10] sm:$0xf]
    %v295 = vld [vmem:[%s289 + $0x14] sm:$0xf]
    %v296 = vld [vmem:[%s289 + $0x18] sm:$0xf]
    %v297 = vld [vmem:[%s289 + $0x1c] sm:$0xf]
    %v298 = vld [vmem:[%s289 + $0x20] sm:$0xf]
    %v299 = vld [vmem:[%s289 + $0x24] sm:$0xf]
    %v300 = vld [vmem:[%s289 + $0x28] sm:$0xf]
    %v301 = vld [vmem:[%s289 + $0x2c] sm:$0xf]
    %v302 = vld [vmem:[%s289 + $0x30] sm:$0xf]
    %v303 = vld [vmem:[%s289 + $0x34] sm:$0xf]
    %v304 = vld [vmem:[%s289 + $0x38] sm:$0xf]
    %v305 = vld [vmem:[%s289 + $0x3c] sm:$0xf]
    %v306 = vpack.c.bf16 %v226, %v223
    %v307 = vpack.c.bf16 %v234, %v231
    %v308 = vpack.c.bf16 %v242, %v239
    %v309 = vpack.c.bf16 %v250, %v247
    %v310 = vpack.c.bf16 %v258, %v255
    %v311 = vpack.c.bf16 %v266, %v263
    %v312 = vpack.c.bf16 %v274, %v271
    %v313 = vpack.c.bf16 %v282, %v279
    %v330 = vunpack.c.l.b16 %v290
    %v331 = vunpack.c.l.b16 %v291
    %v332 = vunpack.c.l.b16 %v292
    %v333 = vunpack.c.l.b16 %v293
    %v334 = vunpack.c.l.b16 %v294
    %v335 = vunpack.c.l.b16 %v295
    %v336 = vunpack.c.l.b16 %v296
    %v337 = vunpack.c.l.b16 %v297
    %v338 = vunpack.c.l.b16 %v298
    %v339 = vunpack.c.l.b16 %v299
    %v340 = vunpack.c.l.b16 %v300
    %v341 = vunpack.c.l.b16 %v301
    %v342 = vunpack.c.l.b16 %v302
    %v343 = vunpack.c.l.b16 %v303
    %v344 = vunpack.c.l.b16 %v304
    %v345 = vunpack.c.l.b16 %v305
    %v346 = vpack.c.b16 %v331, %v330
    %v347 = vpack.c.b16 %v333, %v332
    %v348 = vpack.c.b16 %v335, %v334
    %v349 = vpack.c.b16 %v337, %v336
    %v350 = vpack.c.b16 %v339, %v338
    %v351 = vpack.c.b16 %v341, %v340
    %v352 = vpack.c.b16 %v343, %v342
    %v353 = vpack.c.b16 %v345, %v344
    %v362 = vld [vmem:[#allocation7] sm:$0xf]
    %v363 = vld [vmem:[#allocation7 + $0x4] sm:$0xf]
    %v364 = vld [vmem:[#allocation7 + $0x8] sm:$0xf]
    %v365 = vld [vmem:[#allocation7 + $0xc] sm:$0xf]
    %v366 = vld [vmem:[#allocation7 + $0x10] sm:$0xf]
    %v367 = vld [vmem:[#allocation7 + $0x14] sm:$0xf]
    %v368 = vld [vmem:[#allocation7 + $0x18] sm:$0xf]
    %v369 = vld [vmem:[#allocation7 + $0x1c] sm:$0xf]
    %v370 = vld [vmem:[#allocation7 + $0x20] sm:$0xf]
    %v371 = vld [vmem:[#allocation7 + $0x24] sm:$0xf]
    %v372 = vld [vmem:[#allocation7 + $0x28] sm:$0xf]
    %v373 = vld [vmem:[#allocation7 + $0x2c] sm:$0xf]
    %v374 = vld [vmem:[#allocation7 + $0x30] sm:$0xf]
    %v375 = vld [vmem:[#allocation7 + $0x34] sm:$0xf]
    %v376 = vld [vmem:[#allocation7 + $0x38] sm:$0xf]
    %v377 = vld [vmem:[#allocation7 + $0x3c] sm:$0xf]
    %v378 = vld [vmem:[#allocation7 + $0x40] sm:$0xf]
    %v379 = vld [vmem:[#allocation7 + $0x44] sm:$0xf]
    %v380 = vld [vmem:[#allocation7 + $0x48] sm:$0xf]
    %v381 = vld [vmem:[#allocation7 + $0x4c] sm:$0xf]
    %v382 = vld [vmem:[#allocation7 + $0x50] sm:$0xf]
    %v383 = vld [vmem:[#allocation7 + $0x54] sm:$0xf]
    %v384 = vld [vmem:[#allocation7 + $0x58] sm:$0xf]
    %v385 = vld [vmem:[#allocation7 + $0x5c] sm:$0xf]
    %v386 = vld [vmem:[#allocation7 + $0x60] sm:$0xf]
    %v387 = vld [vmem:[#allocation7 + $0x64] sm:$0xf]
    %v388 = vld [vmem:[#allocation7 + $0x68] sm:$0xf]
    %v389 = vld [vmem:[#allocation7 + $0x6c] sm:$0xf]
    %v390 = vld [vmem:[#allocation7 + $0x70] sm:$0xf]
    %v391 = vld [vmem:[#allocation7 + $0x74] sm:$0xf]
    %v392 = vld [vmem:[#allocation7 + $0x78] sm:$0xf]
    %v393 = vld [vmem:[#allocation7 + $0x7c] sm:$0xf]
    %v394 = vld [vmem:[%s3] sm:$0x1]
    %v396 = vlaneseq
    %v397 = vshrl.u32 %v396, 7
    %v398 = vsub.s32 0, %v397
    %v399 = vrot.slane %v394, %v398
    %v433 = vunpack.c.l.b16 %v362
    %v434 = vunpack.c.l.b16 %v363
    %v435 = vunpack.c.l.b16 %v364
    %v436 = vunpack.c.l.b16 %v365
    %v437 = vunpack.c.l.b16 %v366
    %v438 = vunpack.c.l.b16 %v367
    %v439 = vunpack.c.l.b16 %v368
    %v440 = vunpack.c.l.b16 %v369
    %v441 = vunpack.c.l.b16 %v370
    %v442 = vunpack.c.l.b16 %v371
    %v443 = vunpack.c.l.b16 %v372
    %v444 = vunpack.c.l.b16 %v373
    %v445 = vunpack.c.l.b16 %v374
    %v446 = vunpack.c.l.b16 %v375
    %v447 = vunpack.c.l.b16 %v376
    %v448 = vunpack.c.l.b16 %v377
    %v449 = vunpack.c.l.b16 %v378
    %v450 = vunpack.c.l.b16 %v379
    %v451 = vunpack.c.l.b16 %v380
    %v452 = vunpack.c.l.b16 %v381
    %v453 = vunpack.c.l.b16 %v382
    %v454 = vunpack.c.l.b16 %v383
    %v455 = vunpack.c.l.b16 %v384
    %v456 = vunpack.c.l.b16 %v385
    %v457 = vunpack.c.l.b16 %v386
    %v458 = vunpack.c.l.b16 %v387
    %v459 = vunpack.c.l.b16 %v388
    %v460 = vunpack.c.l.b16 %v389
    %v461 = vunpack.c.l.b16 %v390
    %v462 = vunpack.c.l.b16 %v391
    %v463 = vunpack.c.l.b16 %v392
    %v464 = vunpack.c.l.b16 %v393
    %v465 = vpack.c.b16 %v434, %v433
    %v466 = vpack.c.b16 %v436, %v435
    %v467 = vpack.c.b16 %v438, %v437
    %v468 = vpack.c.b16 %v440, %v439
    %v469 = vpack.c.b16 %v442, %v441
    %v470 = vpack.c.b16 %v444, %v443
    %v471 = vpack.c.b16 %v446, %v445
    %v472 = vpack.c.b16 %v448, %v447
    %v473 = vpack.c.b16 %v450, %v449
    %v474 = vpack.c.b16 %v452, %v451
    %v475 = vpack.c.b16 %v454, %v453
    %v476 = vpack.c.b16 %v456, %v455
    %v477 = vpack.c.b16 %v458, %v457
    %v478 = vpack.c.b16 %v460, %v459
    %v479 = vpack.c.b16 %v462, %v461
    %v480 = vpack.c.b16 %v464, %v463
    %497 = vmatprep.subr.bf16.mxu0 0
    %498 = vmatpush1.bf16.msra.mxu0 %v472
    %499 = vmatprep.subr.bf16.mxu0 0
    %500 = vmatpush1.bf16.msra.mxu0 %v471
    %501 = vmatprep.subr.bf16.mxu0 0
    %502 = vmatpush1.bf16.msra.mxu0 %v470
    %503 = vmatprep.subr.bf16.mxu0 0
    %504 = vmatpush1.bf16.msra.mxu0 %v469
    %505 = vmatprep.subr.bf16.mxu0 0
    %506 = vmatpush1.bf16.msra.mxu0 %v468
    %507 = vmatprep.subr.bf16.mxu0 0
    %508 = vmatpush1.bf16.msra.mxu0 %v467
    %509 = vmatprep.subr.bf16.mxu0 0
    %510 = vmatpush1.bf16.msra.mxu0 %v466
    %511 = vmatprep.subr.bf16.mxu0 0
    %512 = vmatpush1.bf16.msra.mxu0 %v465
    %513 = vmatprep.subr.bf16.mxu0 0
    %514 = vmatpush2.bf16.msra.mxu0 %v480
    %515 = vmatprep.subr.bf16.mxu0 0
    %516 = vmatpush2.bf16.msra.mxu0 %v479
    %517 = vmatprep.subr.bf16.mxu0 0
    %518 = vmatpush2.bf16.msra.mxu0 %v478
    %519 = vmatprep.subr.bf16.mxu0 0
    %520 = vmatpush2.bf16.msra.mxu0 %v477
    %521 = vmatprep.subr.bf16.mxu0 0
    %522 = vmatpush2.bf16.msra.mxu0 %v476
    %523 = vmatprep.subr.bf16.mxu0 0
    %524 = vmatpush2.bf16.msra.mxu0 %v475
    %525 = vmatprep.subr.bf16.mxu0 0
    %526 = vmatpush2.bf16.msra.mxu0 %v474
    %527 = vmatprep.subr.bf16.mxu0 0
    %528 = vmatpush2.bf16.msra.mxu0 %v473
    %529 = vmatprep.mubr.bf16.mxu0 %v346
    %530 = vmatmul.mubr.bf16.gmra.mxu0 %v306
    %v531 = vpop.f32.mrf.mxu0
    %v532 = vadd.f32 %v399, %v531
    %v533 = vpop.f32.mrf.mxu0
    %v534 = vpop.f32.mrf.mxu0
    %v535 = vadd.f32 %v399, %v534
    %v536 = vpop.f32.mrf.mxu0
    %537 = vmatprep.mubr.bf16.mxu0 %v347
    %538 = vmatmul.mubr.bf16.gmra.mxu0 %v307
    %v539 = vpop.f32.mrf.mxu0
    %v540 = vadd.f32 %v399, %v539
    %v541 = vpop.f32.mrf.mxu0
    %v542 = vpop.f32.mrf.mxu0
    %v543 = vadd.f32 %v399, %v542
    %v544 = vpop.f32.mrf.mxu0
    %545 = vmatprep.mubr.bf16.mxu0 %v348
    %546 = vmatmul.mubr.bf16.gmra.mxu0 %v308
    %v547 = vpop.f32.mrf.mxu0
    %v548 = vadd.f32 %v399, %v547
    %v549 = vpop.f32.mrf.mxu0
    %v550 = vpop.f32.mrf.mxu0
    %v551 = vadd.f32 %v399, %v550
    %v552 = vpop.f32.mrf.mxu0
    %553 = vmatprep.mubr.bf16.mxu0 %v349
    %554 = vmatmul.mubr.bf16.gmra.mxu0 %v309
    %v555 = vpop.f32.mrf.mxu0
    %v556 = vadd.f32 %v399, %v555
    %v557 = vpop.f32.mrf.mxu0
    %v558 = vpop.f32.mrf.mxu0
    %v559 = vadd.f32 %v399, %v558
    %v560 = vpop.f32.mrf.mxu0
    %561 = vmatprep.mubr.bf16.mxu0 %v350
    %562 = vmatmul.mubr.bf16.gmra.mxu0 %v310
    %v563 = vpop.f32.mrf.mxu0
    %v564 = vadd.f32 %v399, %v563
    %v565 = vpop.f32.mrf.mxu0
    %v566 = vpop.f32.mrf.mxu0
    %v567 = vadd.f32 %v399, %v566
    %v568 = vpop.f32.mrf.mxu0
    %569 = vmatprep.mubr.bf16.mxu0 %v351
    %570 = vmatmul.mubr.bf16.gmra.mxu0 %v311
    %v571 = vpop.f32.mrf.mxu0
    %v572 = vadd.f32 %v399, %v571
    %v573 = vpop.f32.mrf.mxu0
    %v574 = vpop.f32.mrf.mxu0
    %v575 = vadd.f32 %v399, %v574
    %v576 = vpop.f32.mrf.mxu0
    %577 = vmatprep.mubr.bf16.mxu0 %v352
    %578 = vmatmul.mubr.bf16.gmra.mxu0 %v312
    %v579 = vpop.f32.mrf.mxu0
    %v580 = vadd.f32 %v399, %v579
    %v581 = vpop.f32.mrf.mxu0
    %v582 = vpop.f32.mrf.mxu0
    %v583 = vadd.f32 %v399, %v582
    %v584 = vpop.f32.mrf.mxu0
    %585 = vmatprep.mubr.bf16.mxu0 %v353
    %586 = vmatmul.mubr.bf16.gmra.mxu0 %v313
    %v587 = vpop.f32.mrf.mxu0
    %v588 = vadd.f32 %v399, %v587
    %v589 = vpop.f32.mrf.mxu0
    %v590 = vpop.f32.mrf.mxu0
    %v591 = vadd.f32 %v399, %v590
    %v592 = vpop.f32.mrf.mxu0
    %593 = vdwg.mxu0
    %v594 = vmax.f32 %v532, 0.0
    %v595 = vmax.f32 %v535, 0.0
    %v596 = vmax.f32 %v540, 0.0
    %v597 = vmax.f32 %v543, 0.0
    %v598 = vmax.f32 %v548, 0.0
    %v599 = vmax.f32 %v551, 0.0
    %v600 = vmax.f32 %v556, 0.0
    %v601 = vmax.f32 %v559, 0.0
    %v602 = vmax.f32 %v564, 0.0
    %v603 = vmax.f32 %v567, 0.0
    %v604 = vmax.f32 %v572, 0.0
    %v605 = vmax.f32 %v575, 0.0
    %v606 = vmax.f32 %v580, 0.0
    %v607 = vmax.f32 %v583, 0.0
    %v608 = vmax.f32 %v588, 0.0
    %v609 = vmax.f32 %v591, 0.0
    %v610 = vpack.c.bf16 %v595, %v594
    %v611 = vpack.c.bf16 %v597, %v596
    %v612 = vpack.c.bf16 %v599, %v598
    %v613 = vpack.c.bf16 %v601, %v600
    %v614 = vpack.c.bf16 %v603, %v602
    %v615 = vpack.c.bf16 %v605, %v604
    %v616 = vpack.c.bf16 %v607, %v606
    %v617 = vpack.c.bf16 %v609, %v608
    %v626 = vunpack.c.l.b16 %v610
    %v627 = vunpack.c.h.b16 %v610
    %v628 = vunpack.c.l.b16 %v611
    %v629 = vunpack.c.h.b16 %v611
    %v630 = vunpack.c.l.b16 %v612
    %v631 = vunpack.c.h.b16 %v612
    %v632 = vunpack.c.l.b16 %v613
    %v633 = vunpack.c.h.b16 %v613
    %v634 = vunpack.c.l.b16 %v614
    %v635 = vunpack.c.h.b16 %v614
    %v636 = vunpack.c.l.b16 %v615
    %v637 = vunpack.c.h.b16 %v615
    %v638 = vunpack.c.l.b16 %v616
    %v639 = vunpack.c.h.b16 %v616
    %v640 = vunpack.c.l.b16 %v617
    %v641 = vunpack.c.h.b16 %v617
    %v642 = vpack.c.b16 %v626, %v626
    %v643 = vpack.c.b16 %v627, %v627
    %v644 = vpack.c.b16 %v628, %v628
    %v645 = vpack.c.b16 %v629, %v629
    %v646 = vpack.c.b16 %v630, %v630
    %v647 = vpack.c.b16 %v631, %v631
    %v648 = vpack.c.b16 %v632, %v632
    %v649 = vpack.c.b16 %v633, %v633
    %v650 = vpack.c.b16 %v634, %v634
    %v651 = vpack.c.b16 %v635, %v635
    %v652 = vpack.c.b16 %v636, %v636
    %v653 = vpack.c.b16 %v637, %v637
    %v654 = vpack.c.b16 %v638, %v638
    %v655 = vpack.c.b16 %v639, %v639
    %v656 = vpack.c.b16 %v640, %v640
    %v657 = vpack.c.b16 %v641, %v641
    %674 = vst [vmem:[#allocation8] sm:$0xf] %v642
    %675 = vst [vmem:[#allocation8 + $0x4] sm:$0xf] %v643
    %676 = vst [vmem:[#allocation8 + $0x8] sm:$0xf] %v644
    %677 = vst [vmem:[#allocation8 + $0xc] sm:$0xf] %v645
    %678 = vst [vmem:[#allocation8 + $0x10] sm:$0xf] %v646
    %679 = vst [vmem:[#allocation8 + $0x14] sm:$0xf] %v647
    %680 = vst [vmem:[#allocation8 + $0x18] sm:$0xf] %v648
    %681 = vst [vmem:[#allocation8 + $0x1c] sm:$0xf] %v649
    %682 = vst [vmem:[#allocation8 + $0x20] sm:$0xf] %v650
    %683 = vst [vmem:[#allocation8 + $0x24] sm:$0xf] %v651
    %684 = vst [vmem:[#allocation8 + $0x28] sm:$0xf] %v652
    %685 = vst [vmem:[#allocation8 + $0x2c] sm:$0xf] %v653
    %686 = vst [vmem:[#allocation8 + $0x30] sm:$0xf] %v654
    %687 = vst [vmem:[#allocation8 + $0x34] sm:$0xf] %v655
    %688 = vst [vmem:[#allocation8 + $0x38] sm:$0xf] %v656
    %689 = vst [vmem:[#allocation8 + $0x3c] sm:$0xf] %v657
    // Predicated region
    $region30: #{tpu_custom_call.1} parent=1 // pred_check
      _
    $region31: #{tpu_custom_call.1} parent=1 // pred_check_branch
      %691 = sbr.rel (0) target = $region33
    $region32: #{tpu_custom_call.1} parent=1 // pred_region
      %s693 = ssub.s32 1024, 1024
      %694 = vsyncadd [#allocation4], %s693
      %s695 = sshll.u32 [#allocation8], 4
      %s696 = int_to_ptr.vmem [resolvable:$true] %s695
      %701 = dma.vmem_to_hbm [thread:$0]  %s696, 1024, %s4, [#allocation4], 64, 64, 4
    $region33: #{tpu_custom_call.1} parent=1 // pred_fallthru
      _
    // Predicated region
    $region34: #{tpu_custom_call.1} parent=1 // pred_check
      _
    $region35: #{tpu_custom_call.1} parent=1 // pred_check_branch
      %703 = sbr.rel (0) target = $region37
    $region36: #{tpu_custom_call.1} parent=1 // pred_region
      %704 = dma.done [#allocation4], 1024
    $region37: #{tpu_custom_call.1} parent=1 // pred_fallthru
      _
    %705 = vsyncpa [#allocation3], 1
    %706 = vsyncpa [#allocation6], 1
    %707 = vsyncpa [#allocation4], 1

</llo_original>
